<compile_context>
chip_gen: v6e
topology: v6e:2x2x1
jax: 0.10.0
libtpu: 0.0.40
codegen_flags: <defaults>
</compile_context>

<pallas_src>
import functools

import jax
import jax.numpy as jnp
from jax.experimental import pallas as pl
from jax.experimental.pallas import tpu as pltpu


_VMEM_BUDGET = 40 * 1024 * 1024   # per-step working-set budget (safe on v7x)
_VMEM_LIMIT = 48 * 1024 * 1024    # scoped-VMEM cap handed to Mosaic


def _center_loss_kernel(f_ref, l_ref, c_ref, cn_ref, ps_ref, pc_ref, *, hw):
    t = pl.program_id(1)

    @pl.when(t == 0)
    def _():
        ps_ref[...] = jnp.zeros_like(ps_ref)
        pc_ref[...] = jnp.zeros_like(pc_ref)

    feats = f_ref[0]                       # (D, TN)   stream dtype (bf16/f32)
    labels = l_ref[0]                      # (1, TN)   int32
    neg2c = c_ref[...]                     # (C, D)    = -2 * centers
    c_norm = cn_ref[...]                   # (C, 1)    f32, ||c||^2 per class

    num_classes = neg2c.shape[0]
    tn = labels.shape[-1]

    # Single MXU matmul, contraction over K = D, f32 accumulate: g = -2<c, f>.
    g = jnp.dot(neg2c, feats, preferred_element_type=jnp.float32)      # (C, TN)

    # Class selection without a (C, TN) iota or one-hot multiplies:
    # labels (1, TN) broadcast-compared against a (C, 1) class-id column.
    class_ids = jax.lax.broadcasted_iota(jnp.int32, (num_classes, 1), 0)
    sel = jnp.sum(jnp.where(labels == class_ids, c_norm + g, 0.0),
                  axis=0, keepdims=True)                               # (1, TN)

    # ||f||^2: square in stream dtype (bf16 VALU on v6e/v7x), accumulate f32.
    f_norm = jnp.sum(feats * feats, axis=0, keepdims=True,
                     dtype=jnp.float32)                                # (1, TN)

    sq = f_norm + sel                                                  # (1, TN)

    # Valid = in-range pixel (ragged last tile, no pre-pad pass) and label
    # not in {0, 255}.  Use where (not multiply) so garbage lanes in the
    # ragged tail (possibly NaN/Inf) cannot poison the partial sums.
    pix = t * tn + jax.lax.broadcasted_iota(jnp.int32, (1, tn), 1)
    valid = (pix < hw) & (labels != 0) & (labels != 255)

    ps_ref[0] += jnp.sum(jnp.where(valid, sq, 0.0), keepdims=True)     # (1, 1)
    pc_ref[0] += jnp.sum(valid.astype(jnp.float32), keepdims=True)     # (1, 1)


def _bilinear_resize_nchw(x, out_h, out_w):
    """Matches torch F.interpolate(mode='bilinear', align_corners=False).

    Arithmetic runs in x.dtype (bf16 for the streaming path, f32 for the
    exact-validation path), halving the HBM traffic of the glue pass.
    """
    # TODO(synk): fully fuse the resize into the Pallas kernel (manual DMA of
    # source rows per pixel tile) to cut the remaining extra HBM passes.
    dtype = x.dtype
    _, _, in_h, in_w = x.shape

    def src_idx(out_len, in_len):
        scale = in_len / out_len
        s = (jnp.arange(out_len, dtype=jnp.float32) + 0.5) * scale - 0.5
        s = jnp.maximum(s, 0.0)
        i0 = jnp.minimum(jnp.floor(s).astype(jnp.int32), in_len - 1)
        i1 = jnp.minimum(i0 + 1, in_len - 1)
        w1 = jnp.clip(s - i0.astype(jnp.float32), 0.0, 1.0)
        return i0, i1, (1.0 - w1).astype(dtype), w1.astype(dtype)

    y0, y1, wy0, wy1 = src_idx(out_h, in_h)
    x0, x1, wx0, wx1 = src_idx(out_w, in_w)

    top = (x[:, :, y0, :] * wy0[None, None, :, None]
           + x[:, :, y1, :] * wy1[None, None, :, None])
    out = top[:, :, :, x0] * wx0 + top[:, :, :, x1] * wx1
    return out   # stays NCHW -> flatten to [B, D, H*W] is free


def center_loss(features, labels, centers, *, tile_n=8192,
                feat_dtype=jnp.bfloat16):
    """features: [B, D, H, W] float; labels: [B, Hl, Wl] int; centers: [C, D]."""
    b, d, _, _ = features.shape
    out_h, out_w = labels.shape[-2:]
    num_classes = centers.shape[0]
    hw = out_h * out_w

    # Resize in the streaming dtype, flatten spatial dims (free reshape).
    feats = _bilinear_resize_nchw(features.astype(feat_dtype), out_h, out_w)
    feats = feats.reshape(b, d, hw)
    labels_flat = labels.reshape(b, 1, hw).astype(jnp.int32)

    # Pre-scale centers by -2 so the kernel's matmul directly yields -2<c,f>;
    # ||c||^2 is computed once from the f32 originals.
    neg2c = (-2.0 * centers.astype(jnp.float32)).astype(feat_dtype)     # (C, D)
    c_norm = jnp.sum(centers.astype(jnp.float32) ** 2, axis=1,
                     keepdims=True)                                     # (C, 1)

    # Large lane tiles (multiple of 128); clamp for tiny inputs and budget the
    # per-step working set so it fits v7x's 64 MiB VMEM with double-buffering.
    feat_bytes = jnp.dtype(feat_dtype).itemsize
    tile = max(128, (int(tile_n) // 128) * 128)
    tile = min(tile, pl.cdiv(hw, 128) * 128)

    def footprint(t):
        stream = 2 * t * (d * feat_bytes + 4)          # dbl-buffered feats+labels
        interm = t * (4 * d + 16 * num_classes + 16)   # f32 temporaries
        const = 2 * num_classes * (d * feat_bytes + 4)  # centers + c_norm
        return stream + interm + const

    while tile > 512 and footprint(tile) > _VMEM_BUDGET:
        tile = max(512, ((tile // 2) // 128) * 128)

    grid = (b, pl.cdiv(hw, tile))   # ragged last tile handled in-kernel

    kernel = functools.partial(_center_loss_kernel, hw=hw)

    part_sum, part_cnt = pl.pallas_call(
        kernel,
        out_shape=(jax.ShapeDtypeStruct((b, 1, 1), jnp.float32),
                   jax.ShapeDtypeStruct((b, 1, 1), jnp.float32)),
        grid_spec=pltpu.PrefetchScalarGridSpec(
            num_scalar_prefetch=0,
            grid=grid,
            in_specs=[
                pl.BlockSpec((1, d, tile), lambda bi, ti: (bi, 0, ti)),
                pl.BlockSpec((1, 1, tile), lambda bi, ti: (bi, 0, ti)),
                pl.BlockSpec((num_classes, d), lambda bi, ti: (0, 0)),
                pl.BlockSpec((num_classes, 1), lambda bi, ti: (0, 0)),
            ],
            out_specs=[
                pl.BlockSpec((1, 1, 1), lambda bi, ti: (bi, 0, 0)),
                pl.BlockSpec((1, 1, 1), lambda bi, ti: (bi, 0, 0)),
            ],
        ),
        compiler_params=pltpu.CompilerParams(
            dimension_semantics=("parallel", "arbitrary"),
            vmem_limit_bytes=_VMEM_LIMIT),
    )(feats, labels_flat, neg2c, c_norm)

    # Cross-batch reduction of the per-batch partials (keeps the batch grid
    # axis megacore-parallel).  NaN if no valid pixel exists, matching
    # torch.mean over an empty selection.
    return jnp.sum(part_sum) / jnp.sum(part_cnt)


def _center_loss_ref(features, labels, centers):
    """Pure-JAX f32 reference matching the PyTorch module semantics."""
    d = features.shape[1]
    out_h, out_w = labels.shape[-2:]
    feats = _bilinear_resize_nchw(features.astype(jnp.float32), out_h, out_w)
    feats_flat = jnp.transpose(feats, (0, 2, 3, 1)).reshape(-1, d)
    labels_flat = labels.reshape(-1)
    mask = jnp.logical_and(labels_flat != 0, labels_flat != 255)
    cb = centers[jnp.clip(labels_flat, 0, centers.shape[0] - 1)].astype(jnp.float32)
    sq = jnp.sum((feats_flat - cb) ** 2, axis=1)
    return jnp.sum(sq * mask) / jnp.sum(mask)


if __name__ == "__main__":
    key = jax.random.PRNGKey(0)
    batch, feat_dim, in_h, in_w = 2, 32, 8, 8
    num_classes = 8
    lbl_h, lbl_w = 16, 16

    k1, k2, k3 = jax.random.split(key, 3)
    features = jax.random.normal(k1, (batch, feat_dim, in_h, in_w),
                                 dtype=jnp.float32)
    labels = jax.random.randint(k2, (batch, lbl_h, lbl_w), 0,
                                num_classes).astype(jnp.int32)
    # sprinkle some ignore pixels (255)
    ignore = jax.random.bernoulli(k3, 0.1, (batch, lbl_h, lbl_w))
    labels = jnp.where(ignore, 255, labels)

    # deterministic "fixed centers" parameter
    centers = jax.random.normal(jax.random.PRNGKey(1),
                                (num_classes, feat_dim), dtype=jnp.float32)

    ref = _center_loss_ref(features, labels, centers)

    # Exact-logic check: stream features in f32 (resize also runs in f32).
    loss_f32 = jax.block_until_ready(
        center_loss(features, labels, centers, feat_dtype=jnp.float32))
    assert jnp.allclose(loss_f32, ref, rtol=5e-3, atol=5e-3), (loss_f32, ref)

    # Default bandwidth-optimized path: bf16 resize + bf16 streaming.
    loss = jax.block_until_ready(center_loss(features, labels, centers))
    assert jnp.allclose(loss, ref, rtol=2e-2, atol=2e-2), (loss, ref)

    print("KERNEL_OK")
</pallas_src>

<mosaic_0001>
module attributes {stable_mosaic.version = 11 : i64} {
  func.func @_center_loss_kernel(%arg0: i32, %arg1: i32, %arg2: memref<1x32x256xf32, #tpu.memory_space<vmem>>, %arg3: memref<1x1x256xi32, #tpu.memory_space<vmem>>, %arg4: memref<8x32xf32, #tpu.memory_space<vmem>>, %arg5: memref<8x1xf32, #tpu.memory_space<vmem>>, %arg6: memref<1x1x1xf32, #tpu.memory_space<vmem>>, %arg7: memref<1x1x1xf32, #tpu.memory_space<vmem>>) attributes {dimension_semantics = [#tpu.dimension_semantics<parallel>, #tpu.dimension_semantics<arbitrary>], iteration_bounds = array<i64: 2, 1>, scalar_prefetch = 0 : i64, scratch_operands = 0 : i64, tpu.core_type = #tpu.core_type<tc>, window_params = [{transform_indices = @transform_0, window_bounds = array<i64: 1, 32, 256>}, {transform_indices = @transform_1, window_bounds = array<i64: 1, 1, 256>}, {pipeline_mode = #tpu.pipeline_mode<synchronous>, transform_indices = @transform_2, window_bounds = array<i64: 8, 32>}, {pipeline_mode = #tpu.pipeline_mode<synchronous>, transform_indices = @transform_3, window_bounds = array<i64: 8, 1>}, {transform_indices = @transform_4, window_bounds = array<i64: 1, 1, 1>}, {transform_indices = @transform_5, window_bounds = array<i64: 1, 1, 1>}]} {
    %c0_i32 = arith.constant 0 : i32
    %0 = arith.cmpi eq, %arg1, %c0_i32 : i32
    %1 = arith.extui %0 : i1 to i32
    %c0_i32_0 = arith.constant 0 : i32
    %2 = arith.cmpi ne, %1, %c0_i32_0 : i32
    scf.if %2 {
      %cst_30 = arith.constant 0.000000e+00 : f32
      %62 = vector.broadcast %cst_30 : f32 to vector<1x1x1xf32>
      %c0_31 = arith.constant 0 : index
      %c0_32 = arith.constant 0 : index
      %c0_33 = arith.constant 0 : index
      %63 = vector.load %arg6[%c0_31, %c0_32, %c0_33] : memref<1x1x1xf32, #tpu.memory_space<vmem>>, vector<1x1x1xf32>
      tpu.vector_store %arg6[%c0_31, %c0_32, %c0_33], %62 {strides = array<i32>} : memref<1x1x1xf32, #tpu.memory_space<vmem>>, vector<1x1x1xf32>,
      %cst_34 = arith.constant 0.000000e+00 : f32
      %64 = vector.broadcast %cst_34 : f32 to vector<1x1x1xf32>
      %c0_35 = arith.constant 0 : index
      %c0_36 = arith.constant 0 : index
      %c0_37 = arith.constant 0 : index
      %65 = vector.load %arg7[%c0_35, %c0_36, %c0_37] : memref<1x1x1xf32, #tpu.memory_space<vmem>>, vector<1x1x1xf32>
      tpu.vector_store %arg7[%c0_35, %c0_36, %c0_37], %64 {strides = array<i32>} : memref<1x1x1xf32, #tpu.memory_space<vmem>>, vector<1x1x1xf32>,
    } else {
    }
    %c0 = arith.constant 0 : index
    %c0_1 = arith.constant 0 : index
    %c0_2 = arith.constant 0 : index
    %3 = vector.load %arg2[%c0, %c0_1, %c0_2] : memref<1x32x256xf32, #tpu.memory_space<vmem>>, vector<1x32x256xf32>
    %4 = vector.shape_cast %3 : vector<1x32x256xf32> to vector<32x256xf32>
    %c0_3 = arith.constant 0 : index
    %c0_4 = arith.constant 0 : index
    %c0_5 = arith.constant 0 : index
    %5 = vector.load %arg3[%c0_3, %c0_4, %c0_5] : memref<1x1x256xi32, #tpu.memory_space<vmem>>, vector<1x1x256xi32>
    %6 = vector.shape_cast %5 : vector<1x1x256xi32> to vector<1x256xi32>
    %c0_6 = arith.constant 0 : index
    %c0_7 = arith.constant 0 : index
    %7 = vector.load %arg4[%c0_6, %c0_7] : memref<8x32xf32, #tpu.memory_space<vmem>>, vector<8x32xf32>
    %c0_8 = arith.constant 0 : index
    %c0_9 = arith.constant 0 : index
    %8 = vector.load %arg5[%c0_8, %c0_9] : memref<8x1xf32, #tpu.memory_space<vmem>>, vector<8x1xf32>
    %cst = arith.constant dense<0.000000e+00> : vector<8x256xf32>
    %9 = tpu.matmul %7, %4, %cst {dimension_numbers = #tpu.dot_dimension_numbers<[1], [0], [0], [1], [0, 0, 1, 1], [], []>} : vector<8x32xf32>, vector<32x256xf32>, vector<8x256xf32> -> vector<8x256xf32>
    %10 = tpu.iota {dimensions = array<i32: 0>} : vector<8x1xi32>
    %11 = vector.broadcast %6 : vector<1x256xi32> to vector<8x256xi32>
    %12 = vector.broadcast %10 : vector<8x1xi32> to vector<8x256xi32>
    %13 = arith.cmpi eq, %11, %12 : vector<8x256xi32>
    %14 = vector.broadcast %8 : vector<8x1xf32> to vector<8x256xf32>
    %15 = arith.addf %14, %9 : vector<8x256xf32>
    %cst_10 = arith.constant 0.000000e+00 : f32
    %16 = vector.broadcast %cst_10 : f32 to vector<8x256xf32>
    %17 = arith.select %13, %15, %16 : vector<8x256xi1>, vector<8x256xf32>
    %cst_11 = arith.constant dense<0.000000e+00> : vector<256xf32>
    %18 = vector.multi_reduction <add>, %17, %cst_11 [0] : vector<8x256xf32> to vector<256xf32>
    %19 = vector.shape_cast %18 : vector<256xf32> to vector<1x256xf32>
    %20 = arith.mulf %4, %4 : vector<32x256xf32>
    %cst_12 = arith.constant dense<0.000000e+00> : vector<256xf32>
    %21 = vector.multi_reduction <add>, %20, %cst_12 [0] : vector<32x256xf32> to vector<256xf32>
    %22 = vector.shape_cast %21 : vector<256xf32> to vector<1x256xf32>
    %23 = arith.addf %22, %19 : vector<1x256xf32>
    %c256_i32 = arith.constant 256 : i32
    %24 = arith.muli %arg1, %c256_i32 : i32
    %25 = tpu.iota {dimensions = array<i32: 1>} : vector<1x256xi32>
    %26 = vector.broadcast %24 : i32 to vector<1x256xi32>
    %27 = arith.addi %26, %25 : vector<1x256xi32>
    %c256_i32_13 = arith.constant 256 : i32
    %28 = vector.broadcast %c256_i32_13 : i32 to vector<1x256xi32>
    %29 = arith.cmpi slt, %27, %28 : vector<1x256xi32>
    %c0_i32_14 = arith.constant 0 : i32
    %30 = vector.broadcast %c0_i32_14 : i32 to vector<1x256xi32>
    %31 = arith.cmpi ne, %6, %30 : vector<1x256xi32>
    %32 = arith.andi %29, %31 : vector<1x256xi1>
    %c255_i32 = arith.constant 255 : i32
    %33 = vector.broadcast %c255_i32 : i32 to vector<1x256xi32>
    %34 = arith.cmpi ne, %6, %33 : vector<1x256xi32>
    %35 = arith.andi %32, %34 : vector<1x256xi1>
    %c0_15 = arith.constant 0 : index
    %c0_16 = arith.constant 0 : index
    %c0_17 = arith.constant 0 : index
    %36 = vector.load %arg6[%c0_15, %c0_16, %c0_17] : memref<1x1x1xf32, #tpu.memory_space<vmem>>, vector<1x1x1xf32>
    %37 = vector.shape_cast %36 : vector<1x1x1xf32> to vector<1x1xf32>
    %cst_18 = arith.constant 0.000000e+00 : f32
    %38 = vector.broadcast %cst_18 : f32 to vector<1x256xf32>
    %39 = arith.select %35, %23, %38 : vector<1x256xi1>, vector<1x256xf32>
    %40 = vector.shape_cast %39 : vector<1x256xf32> to vector<1x1x256xf32>
    %cst_19 = arith.constant dense<0.000000e+00> : vector<1xf32>
    %41 = vector.multi_reduction <add>, %40, %cst_19 [1, 2] : vector<1x1x256xf32> to vector<1xf32>
    %42 = vector.shape_cast %41 : vector<1xf32> to vector<1x1x1xf32>
    %43 = vector.extract %42[0, 0, 0] : f32 from vector<1x1x1xf32>
    %44 = vector.broadcast %43 : f32 to vector<1x1xf32>
    %45 = arith.addf %37, %44 : vector<1x1xf32>
    %c0_20 = arith.constant 0 : index
    %c0_21 = arith.constant 0 : index
    %c0_22 = arith.constant 0 : index
    %46 = vector.load %arg6[%c0_20, %c0_21, %c0_22] : memref<1x1x1xf32, #tpu.memory_space<vmem>>, vector<1x1x1xf32>
    %47 = vector.shape_cast %46 : vector<1x1x1xf32> to vector<1x1xf32>
    %48 = vector.shape_cast %45 : vector<1x1xf32> to vector<1x1x1xf32>
    tpu.vector_store %arg6[%c0_20, %c0_21, %c0_22], %48 {strides = array<i32>} : memref<1x1x1xf32, #tpu.memory_space<vmem>>, vector<1x1x1xf32>,
    %c0_23 = arith.constant 0 : index
    %c0_24 = arith.constant 0 : index
    %c0_25 = arith.constant 0 : index
    %49 = vector.load %arg7[%c0_23, %c0_24, %c0_25] : memref<1x1x1xf32, #tpu.memory_space<vmem>>, vector<1x1x1xf32>
    %50 = vector.shape_cast %49 : vector<1x1x1xf32> to vector<1x1xf32>
    %51 = arith.extui %35 : vector<1x256xi1> to vector<1x256xi32>
    %52 = arith.sitofp %51 : vector<1x256xi32> to vector<1x256xf32>
    %53 = vector.shape_cast %52 : vector<1x256xf32> to vector<1x1x256xf32>
    %cst_26 = arith.constant dense<0.000000e+00> : vector<1xf32>
    %54 = vector.multi_reduction <add>, %53, %cst_26 [1, 2] : vector<1x1x256xf32> to vector<1xf32>
    %55 = vector.shape_cast %54 : vector<1xf32> to vector<1x1x1xf32>
    %56 = vector.extract %55[0, 0, 0] : f32 from vector<1x1x1xf32>
    %57 = vector.broadcast %56 : f32 to vector<1x1xf32>
    %58 = arith.addf %50, %57 : vector<1x1xf32>
    %c0_27 = arith.constant 0 : index
    %c0_28 = arith.constant 0 : index
    %c0_29 = arith.constant 0 : index
    %59 = vector.load %arg7[%c0_27, %c0_28, %c0_29] : memref<1x1x1xf32, #tpu.memory_space<vmem>>, vector<1x1x1xf32>
    %60 = vector.shape_cast %59 : vector<1x1x1xf32> to vector<1x1xf32>
    %61 = vector.shape_cast %58 : vector<1x1xf32> to vector<1x1x1xf32>
    tpu.vector_store %arg7[%c0_27, %c0_28, %c0_29], %61 {strides = array<i32>} : memref<1x1x1xf32, #tpu.memory_space<vmem>>, vector<1x1x1xf32>,
    return
  }
  func.func @transform_0(%arg0: i32, %arg1: i32) -> (i32, i32, i32) {
    %c0_i32 = arith.constant 0 : i32
    %c0_i32_0 = arith.constant 0 : i32
    return %arg0, %c0_i32, %arg1 : i32, i32, i32
  }
  func.func @transform_1(%arg0: i32, %arg1: i32) -> (i32, i32, i32) {
    %c0_i32 = arith.constant 0 : i32
    %c0_i32_0 = arith.constant 0 : i32
    return %arg0, %c0_i32, %arg1 : i32, i32, i32
  }
  func.func @transform_2(%arg0: i32, %arg1: i32) -> (i32, i32) {
    %c0_i32 = arith.constant 0 : i32
    %c0_i32_0 = arith.constant 0 : i32
    %c0_i32_1 = arith.constant 0 : i32
    return %c0_i32, %c0_i32_0 : i32, i32
  }
  func.func @transform_3(%arg0: i32, %arg1: i32) -> (i32, i32) {
    %c0_i32 = arith.constant 0 : i32
    %c0_i32_0 = arith.constant 0 : i32
    %c0_i32_1 = arith.constant 0 : i32
    return %c0_i32, %c0_i32_0 : i32, i32
  }
  func.func @transform_4(%arg0: i32, %arg1: i32) -> (i32, i32, i32) {
    %c0_i32 = arith.constant 0 : i32
    %c0_i32_0 = arith.constant 0 : i32
    %c0_i32_1 = arith.constant 0 : i32
    return %arg0, %c0_i32, %c0_i32_0 : i32, i32, i32
  }
  func.func @transform_5(%arg0: i32, %arg1: i32) -> (i32, i32, i32) {
    %c0_i32 = arith.constant 0 : i32
    %c0_i32_0 = arith.constant 0 : i32
    %c0_i32_1 = arith.constant 0 : i32
    return %arg0, %c0_i32, %c0_i32_0 : i32, i32, i32
  }
}

</mosaic_0001>

<llo_original>
// kernel: tpu_custom_call.1
$region0: #{tpu_custom_call.1}
  #allocation0 [shape = 'u32[]', space=smem, size = 0x4, offset = 0x4, fixed_abs, tag = 'smem constant byte address 0x4 - core index']
  #allocation1 [shape = 'u32[144,128]{1,0:T(1,128)}', space=vmem, size = 0x12000, scoped, tag = 'internal scratch']
  %s0 = inlined_call_operand.hbm [shape: f32[2,32,256], index: 0, kind: input, shape index: {}]
  %s1 = inlined_call_operand.vmem [shape: s32[2,1,256], index: 1, kind: input, shape index: {}]
  %s2 = inlined_call_operand.vmem [shape: f32[8,32], index: 2, kind: input, shape index: {}]
  %s3 = inlined_call_operand.vmem [shape: f32[8,1], index: 3, kind: input, shape index: {}]
  %s4 = inlined_call_operand.vmem [shape: f32[2,1,1], index: 4, kind: output, shape index: {0}]
  %s5 = inlined_call_operand.vmem [shape: f32[2,1,1], index: 5, kind: output, shape index: {1}]
  %6 = xla_tuple %s4, %s5
  %s7 = sld [smem:[#allocation0]]
  $region65: #{tpu_custom_call.1} parent=0
    _
  %s9 = ssub.s32 1, %s7
  %s10 = scalar_select 0, %s9, %s7
  $region1: #{tpu_custom_call.1} parent=0
    #allocation2 [shape = 'u8[65536]{0}', space=vmem, size = 0x10000, scoped, tag = 'input window, operand 0']
    #allocation3 [shape = 's32[2]{0}', space=sflag, size = 0x8, scoped, tag = 'scoped memory for tpu_custom_call.1']
    %11 = vsyncpa [#allocation3], 0
    %s12 = scalar_lea.sflag [#allocation3], 1
    %13 = vsyncpa %s12, 0
    loop: start=0, step=1, limit=4
    $region2: #{tpu_custom_call.1} parent=1 // loop_pre_header
      _
    $region3: #{tpu_custom_call.1} parent=1 // loop_header
      %s15 = sphi 0, %s19
      %p16 = scmp.ge.s32.totalorder %s15, 4
      %s22 = sphi 0, %s34
      %s23 = sphi 0, %s30
      %s24 = sphi 0, %s22
      %s25 = sphi 0, %s23
      %s26 = sphi 0, %s24
      %s27 = sphi 0, %s25
      %s39 = sphi 0, %s41
      %s42 = sphi 0, %s39
      %s43 = sphi 0, %s42
      %s59 = sphi 0, %s43
      %s67 = sphi 0, %s69
      %s70 = sphi 0, %s67
      %s71 = sphi 0, %s70
      %s87 = sphi 0, %s71
      %s91 = sphi 0, %s91
      %s93 = sphi 0, %s91
      %s94 = sphi 0, %s93
      %s108 = sphi 0, %s94
      %s112 = sphi 0, %s112
      %s114 = sphi 0, %s112
      %s115 = sphi 0, %s114
      %s129 = sphi 0, %s115
      %s135 = sphi 0, %s137
      %s138 = sphi 0, %s135
      %s139 = sphi 0, %s138
      %s155 = sphi 0, %s139
      %s161 = sphi 0, %s163
      %s164 = sphi 0, %s161
      %s165 = sphi 0, %s164
      %s181 = sphi 0, %s165
    $region4: #{tpu_custom_call.1} parent=1 // loop_header_branch
      %18 = sbr.rel (%p16) target = $region8
    $region5: #{tpu_custom_call.1} parent=1 // loop_body
      %s20 = ssub.s32 %s15, 1
      %s21 = ssub.s32 %s15, 2
      %s28 = sadd.s32 1, %s23
      %p29 = scmp.ge.s32.totalorder %s28, 1
      %s30 = scalar_select %p29, 0, %s28
      %s31 = sadd.s32 1, %s22
      %s32 = scalar_select %p29, %s31, %s22
      %p33 = scmp.ge.s32.totalorder %s32, 2
      %s34 = scalar_select %p33, 0, %s32
      %s35 = ssub.s32 %s22, %s34
      %s36 = ssub.s32 %s23, %s30
      %s37 = sor.u32 %s35, %s36
      %p38 = scmp.eq.s32.totalorder %s37, 0
      %s40 = sadd.s32 %s39, 1
      %s41 = scalar_select %p38, %s39, %s40
      %p44 = pneg %p38
      %p45 = scmp.eq.s32.totalorder %s15, 1
      %p46 = por %p44, %p45
      %p47 = scmp.ne.s32.totalorder %s39, %s42
      %p48 = scmp.eq.s32.totalorder %s15, 0
      %p49 = por %p47, %p48
      %p50 = scmp.ne.s32.totalorder %s39, %s42
      %p51 = scmp.eq.s32.totalorder %s20, 1
      %p52 = por %p50, %p51
      %p53 = scmp.ne.s32.totalorder %s42, %s43
      %p54 = scmp.eq.s32.totalorder %s20, 0
      %p55 = por %p53, %p54
      %p56 = scmp.ne.s32.totalorder %s42, %s43
      %p57 = scmp.eq.s32.totalorder %s21, 1
      %p58 = por %p56, %p57
      %p60 = scmp.ne.s32.totalorder %s43, %s59
      %p61 = scmp.eq.s32.totalorder %s21, 0
      %p62 = por %p60, %p61
      %s63 = ssub.s32 %s22, %s34
      %s64 = ssub.s32 %s23, %s30
      %s65 = sor.u32 %s63, %s64
      %p66 = scmp.eq.s32.totalorder %s65, 0
      %s68 = sadd.s32 %s67, 1
      %s69 = scalar_select %p66, %s67, %s68
      %p72 = pneg %p66
      %p73 = scmp.eq.s32.totalorder %s15, 1
      %p74 = por %p72, %p73
      %p75 = scmp.ne.s32.totalorder %s67, %s70
      %p76 = scmp.eq.s32.totalorder %s15, 0
      %p77 = por %p75, %p76
      %p78 = scmp.ne.s32.totalorder %s67, %s70
      %p79 = scmp.eq.s32.totalorder %s20, 1
      %p80 = por %p78, %p79
      %p81 = scmp.ne.s32.totalorder %s70, %s71
      %p82 = scmp.eq.s32.totalorder %s20, 0
      %p83 = por %p81, %p82
      %p84 = scmp.ne.s32.totalorder %s70, %s71
      %p85 = scmp.eq.s32.totalorder %s21, 1
      %p86 = por %p84, %p85
      %p88 = scmp.ne.s32.totalorder %s71, %s87
      %p89 = scmp.eq.s32.totalorder %s21, 0
      %p90 = por %p88, %p89
      %s92 = sadd.s32 %s91, 1
      %p95 = scmp.eq.s32.totalorder %s15, 1
      %p96 = scmp.ne.s32.totalorder %s91, %s93
      %p97 = scmp.eq.s32.totalorder %s15, 0
      %p98 = por %p96, %p97
      %p99 = scmp.ne.s32.totalorder %s91, %s93
      %p100 = scmp.eq.s32.totalorder %s20, 1
      %p101 = por %p99, %p100
      %p102 = scmp.ne.s32.totalorder %s93, %s94
      %p103 = scmp.eq.s32.totalorder %s20, 0
      %p104 = por %p102, %p103
      %p105 = scmp.ne.s32.totalorder %s93, %s94
      %p106 = scmp.eq.s32.totalorder %s21, 1
      %p107 = por %p105, %p106
      %p109 = scmp.ne.s32.totalorder %s94, %s108
      %p110 = scmp.eq.s32.totalorder %s21, 0
      %p111 = por %p109, %p110
      %s113 = sadd.s32 %s112, 1
      %p116 = scmp.eq.s32.totalorder %s15, 1
      %p117 = scmp.ne.s32.totalorder %s112, %s114
      %p118 = scmp.eq.s32.totalorder %s15, 0
      %p119 = por %p117, %p118
      %p120 = scmp.ne.s32.totalorder %s112, %s114
      %p121 = scmp.eq.s32.totalorder %s20, 1
      %p122 = por %p120, %p121
      %p123 = scmp.ne.s32.totalorder %s114, %s115
      %p124 = scmp.eq.s32.totalorder %s20, 0
      %p125 = por %p123, %p124
      %p126 = scmp.ne.s32.totalorder %s114, %s115
      %p127 = scmp.eq.s32.totalorder %s21, 1
      %p128 = por %p126, %p127
      %p130 = scmp.ne.s32.totalorder %s115, %s129
      %p131 = scmp.eq.s32.totalorder %s21, 0
      %p132 = por %p130, %p131
      %s133 = ssub.s32 %s22, %s34
      %p134 = scmp.eq.s32.totalorder %s133, 0
      %s136 = sadd.s32 %s135, 1
      %s137 = scalar_select %p134, %s135, %s136
      %p140 = pneg %p134
      %p141 = scmp.eq.s32.totalorder %s15, 1
      %p142 = por %p140, %p141
      %p143 = scmp.ne.s32.totalorder %s135, %s138
      %p144 = scmp.eq.s32.totalorder %s15, 0
      %p145 = por %p143, %p144
      %p146 = scmp.ne.s32.totalorder %s135, %s138
      %p147 = scmp.eq.s32.totalorder %s20, 1
      %p148 = por %p146, %p147
      %p149 = scmp.ne.s32.totalorder %s138, %s139
      %p150 = scmp.eq.s32.totalorder %s20, 0
      %p151 = por %p149, %p150
      %p152 = scmp.ne.s32.totalorder %s138, %s139
      %p153 = scmp.eq.s32.totalorder %s21, 1
      %p154 = por %p152, %p153
      %p156 = scmp.ne.s32.totalorder %s139, %s155
      %p157 = scmp.eq.s32.totalorder %s21, 0
      %p158 = por %p156, %p157
      %s159 = ssub.s32 %s22, %s34
      %p160 = scmp.eq.s32.totalorder %s159, 0
      %s162 = sadd.s32 %s161, 1
      %s163 = scalar_select %p160, %s161, %s162
      %p166 = pneg %p160
      %p167 = scmp.eq.s32.totalorder %s15, 1
      %p168 = por %p166, %p167
      %p169 = scmp.ne.s32.totalorder %s161, %s164
      %p170 = scmp.eq.s32.totalorder %s15, 0
      %p171 = por %p169, %p170
      %p172 = scmp.ne.s32.totalorder %s161, %s164
      %p173 = scmp.eq.s32.totalorder %s20, 1
      %p174 = por %p172, %p173
      %p175 = scmp.ne.s32.totalorder %s164, %s165
      %p176 = scmp.eq.s32.totalorder %s20, 0
      %p177 = por %p175, %p176
      %p178 = scmp.ne.s32.totalorder %s164, %s165
      %p179 = scmp.eq.s32.totalorder %s21, 1
      %p180 = por %p178, %p179
      %p182 = scmp.ne.s32.totalorder %s165, %s181
      %p183 = scmp.eq.s32.totalorder %s21, 0
      %p184 = por %p182, %p183
      %p185 = scmp.le.s32.totalorder 1, %s15
      %p186 = scmp.lt.s32.totalorder %s15, 3
      %p187 = pnand %p185, %p186
      %p188 = pneg %p187
      // Predicated region
      $region9: #{tpu_custom_call.1} parent=5 // pred_check
        _
      $region10: #{tpu_custom_call.1} parent=5 // pred_check_branch
        %190 = sbr.rel (%p187) target = $region12
      $region11: #{tpu_custom_call.1} parent=5 // pred_region
        %s191 = ssub.s32 %s15, 1
        // Predicated region
        $region13: #{tpu_custom_call.1} parent=11 // pred_check
          %p192 = pneg %p104
        $region14: #{tpu_custom_call.1} parent=11 // pred_check_branch
          %194 = sbr.rel (%p192) target = $region16
        $region15: #{tpu_custom_call.1} parent=11 // pred_region
          _
        $region16: #{tpu_custom_call.1} parent=11 // pred_fallthru
          _
        // Predicated region
        $region17: #{tpu_custom_call.1} parent=11 // pred_check
          %p195 = pneg %p125
        $region18: #{tpu_custom_call.1} parent=11 // pred_check_branch
          %197 = sbr.rel (%p195) target = $region20
        $region19: #{tpu_custom_call.1} parent=11 // pred_region
          _
        $region20: #{tpu_custom_call.1} parent=11 // pred_fallthru
          _
      $region12: #{tpu_custom_call.1} parent=5 // pred_fallthru
        _
      %p198 = scmp.lt.s32.totalorder %s15, 2
      // Predicated region
      $region21: #{tpu_custom_call.1} parent=5 // pred_check
        %p199 = pneg %p198
      $region22: #{tpu_custom_call.1} parent=5 // pred_check_branch
        %201 = sbr.rel (%p199) target = $region24
      $region23: #{tpu_custom_call.1} parent=5 // pred_region
        // Predicated region
        $region25: #{tpu_custom_call.1} parent=23 // pred_check
          %p202 = pneg %p49
        $region26: #{tpu_custom_call.1} parent=23 // pred_check_branch
          %204 = sbr.rel (%p202) target = $region28
        $region27: #{tpu_custom_call.1} parent=23 // pred_region
          %s205 = sand.u32 %s39, 1
          %s206 = scalar_lea.sflag [#allocation3], %s205
          %s207 = sand.u32 %s39, 1
          %s208 = smul.addr %s207, 64
          %s209 = scalar_lea.vmem [#allocation2], %s208
          %s210 = smul.u32 2, %s23
          %s212 = ssub.s32 1024, 1024
          %213 = vsyncadd %s206, %s212
          %s214 = smul.addr %s22, 8
          %s215 = sadd.s32 %s210, %s214
          %s216 = smul.addr %s215, 128
          %s217 = scalar_lea.hbm %s0, %s216
          %s218 = sshll.u32 %s209, 4
          %s219 = int_to_ptr.vmem [resolvable:$true] %s218
          %224 = dma.hbm_to_vmem [thread:$0]  %s217, 1024, %s219, %s206, 256, 256, 16
        $region28: #{tpu_custom_call.1} parent=23 // pred_fallthru
          _
        // Predicated region
        $region29: #{tpu_custom_call.1} parent=23 // pred_check
          %p225 = pneg %p77
        $region30: #{tpu_custom_call.1} parent=23 // pred_check_branch
          %227 = sbr.rel (%p225) target = $region32
        $region31: #{tpu_custom_call.1} parent=23 // pred_region
          %s228 = smul.u32 2, %s23
          %p229 = scmp.lt.s32.totalorder %s22, 1
          %s230 = scalar_select %p229, %s22, 1
          %p231 = scmp.lt.s32.totalorder %s228, 1
          %s232 = scalar_select %p231, %s228, 1
          %s233 = smul.addr %s230, 2
          %s234 = sadd.s32 %s232, %s233
          %s235 = scalar_lea.vmem %s1, %s234
          %s236 = smul.u32 2, %s23
        $region32: #{tpu_custom_call.1} parent=23 // pred_fallthru
          _
      $region24: #{tpu_custom_call.1} parent=5 // pred_fallthru
        _
      %p237 = scmp.le.s32.totalorder 1, %s15
      %p238 = scmp.lt.s32.totalorder %s15, 3
      %p239 = pnand %p237, %p238
      %p240 = pneg %p239
      // Predicated region
      $region33: #{tpu_custom_call.1} parent=5 // pred_check
        _
      $region34: #{tpu_custom_call.1} parent=5 // pred_check_branch
        %242 = sbr.rel (%p239) target = $region36
      $region35: #{tpu_custom_call.1} parent=5 // pred_region
        %s243 = ssub.s32 %s15, 1
        %s244 = sand.u32 %s42, 1
        %s245 = scalar_lea.sflag [#allocation3], %s244
        %s246 = sand.u32 %s42, 1
        %s247 = smul.addr %s246, 64
        %s248 = scalar_lea.vmem [#allocation2], %s247
        // Predicated region
        $region37: #{tpu_custom_call.1} parent=35 // pred_check
          %p249 = pneg %p55
        $region38: #{tpu_custom_call.1} parent=35 // pred_check_branch
          %251 = sbr.rel (%p249) target = $region40
        $region39: #{tpu_custom_call.1} parent=35 // pred_region
          %252 = dma.done %s245, 1024
        $region40: #{tpu_custom_call.1} parent=35 // pred_fallthru
          _
        %s253 = sand.u32 %s42, 1
        %s254 = scalar_lea.sflag [#allocation3], %s253
        %s255 = sand.u32 %s42, 1
        %s256 = smul.addr %s255, 64
        %s257 = scalar_lea.vmem [#allocation2], %s256
        %p258 = pneg %p55
        %p259 = pneg %p52
        %s260 = smul.u32 2, %s25
        %p261 = scmp.lt.s32.totalorder %s24, 1
        %s262 = scalar_select %p261, %s24, 1
        %p263 = scmp.lt.s32.totalorder %s260, 1
        %s264 = scalar_select %p263, %s260, 1
        %s265 = smul.addr %s262, 2
        %s266 = sadd.s32 %s264, %s265
        %s267 = scalar_lea.vmem %s1, %s266
        %p268 = pneg %p83
        %p269 = pneg %p80
        %p270 = pneg %p104
        %p271 = pneg %p101
        %p272 = pneg %p125
        %p273 = pneg %p122
        %p274 = pneg %p151
        %p275 = pneg %p148
        %p276 = scmp.lt.s32.totalorder %s24, 1
        %s277 = scalar_select %p276, %s24, 1
        %s278 = scalar_lea.vmem %s4, %s277
        %p279 = pneg %p177
        %p280 = pneg %p174
        %p281 = scmp.lt.s32.totalorder %s24, 1
        %s282 = scalar_select %p281, %s24, 1
        %s283 = scalar_lea.vmem %s5, %s282
        %s284 = smul.u32 2, %s25
        %s285 = smul.u32 2, %s25
        %p286 = scmp.lt.s32.totalorder %s24, 1
        %s287 = scalar_select %p286, %s24, 1
        %p288 = scmp.lt.s32.totalorder %s285, 1
        %s289 = scalar_select %p288, %s285, 1
        %s290 = smul.addr %s287, 2
        %s291 = sadd.s32 %s289, %s290
        %s292 = scalar_lea.vmem %s1, %s291
        %s293 = smul.u32 2, %s25
        %p294 = scmp.lt.s32.totalorder %s24, 1
        %s295 = scalar_select %p294, %s24, 1
        %s296 = scalar_lea.vmem %s4, %s295
        %p297 = scmp.lt.s32.totalorder %s24, 1
        %s298 = scalar_select %p297, %s24, 1
        %s299 = scalar_lea.vmem %s5, %s298
        %p300 = scmp.eq.s32.totalorder %s25, 0
        // Predicated region
        $region41: #{tpu_custom_call.1} parent=35 // pred_check
          %p301 = pneg %p300
        $region42: #{tpu_custom_call.1} parent=35 // pred_check_branch
          %303 = sbr.rel (%p301) target = $region44
        $region43: #{tpu_custom_call.1} parent=35 // pred_region
          %vm304 = vcmask 0
          %305 = vst.msk [vmem:[%s296] sm:$0x1] %vm304, 0.0
          %306 = vst.msk [vmem:[%s299] sm:$0x1] %vm304, 0.0
        $region44: #{tpu_custom_call.1} parent=35 // pred_fallthru
          _
        %v307 = vld [vmem:[%s248] sm:$0xff]
        %v308 = vld [vmem:[%s248 + $0x8] sm:$0xff]
        %v309 = vld [vmem:[%s248 + $0x10] sm:$0xff]
        %v310 = vld [vmem:[%s248 + $0x18] sm:$0xff]
        %v311 = vld [vmem:[%s248 + $0x20] sm:$0xff]
        %v312 = vld [vmem:[%s248 + $0x28] sm:$0xff]
        %v313 = vld [vmem:[%s248 + $0x30] sm:$0xff]
        %v314 = vld [vmem:[%s248 + $0x38] sm:$0xff]
        %v315 = vld [vmem:[%s292] sm:$0x3]
        %v316 = vld [vmem:[%s2] sm:$0xff]
        %v317 = vld [vmem:[%s3] sm:$0xff]
        %vm318 = vcmask 261120
        %v320 = vsel %vm318, %v316, 0
        %322 = vmatprep.subr.mxu0 0.0
        %323 = vmatpush1.msra.mxu0 0.0
        %324 = vmatprep.subr.mxu0 0.0
        %325 = vmatpush1.msra.mxu0 0.0
        %326 = vmatprep.subr.mxu0 0.0
        %327 = vmatpush1.msra.mxu0 0.0
        %328 = vmatprep.subr.mxu0 0.0
        %329 = vmatpush1.msra.mxu0 0.0
        %330 = vmatprep.subr.mxu0 0.0
        %331 = vmatpush1.msra.mxu0 0.0
        %332 = vmatprep.subr.mxu0 0.0
        %333 = vmatpush1.msra.mxu0 0.0
        %334 = vmatprep.subr.mxu0 0.0
        %335 = vmatpush1.msra.mxu0 0.0
        %336 = vmatprep.subr.mxu0 0.0
        %337 = vmatpush1.msra.mxu0 0.0
        %338 = vmatprep.subr.mxu0 0.0
        %339 = vmatpush1.msra.mxu0 0.0
        %340 = vmatprep.subr.mxu0 0.0
        %341 = vmatpush1.msra.mxu0 0.0
        %342 = vmatprep.subr.mxu0 0.0
        %343 = vmatpush1.msra.mxu0 0.0
        %344 = vmatprep.subr.mxu0 0.0
        %345 = vmatpush1.msra.mxu0 0.0
        %346 = vmatprep.subr.mxu0 %v314
        %347 = vmatpush1.msra.mxu0 %v313
        %348 = vmatprep.subr.mxu0 %v312
        %349 = vmatpush1.msra.mxu0 %v311
        %350 = vmatprep.subr.mxu0 %v310
        %351 = vmatpush1.msra.mxu0 %v309
        %352 = vmatprep.subr.mxu0 %v308
        %353 = vmatpush1.msra.mxu0 %v307
        %354 = vmatprep.subr.mxu0 0.0
        %355 = vmatpush2.msra.mxu0 0.0
        %356 = vmatprep.subr.mxu0 0.0
        %357 = vmatpush2.msra.mxu0 0.0
        %358 = vmatprep.subr.mxu0 0.0
        %359 = vmatpush2.msra.mxu0 0.0
        %360 = vmatprep.subr.mxu0 0.0
        %361 = vmatpush2.msra.mxu0 0.0
        %362 = vmatprep.subr.mxu0 0.0
        %363 = vmatpush2.msra.mxu0 0.0
        %364 = vmatprep.subr.mxu0 0.0
        %365 = vmatpush2.msra.mxu0 0.0
        %366 = vmatprep.subr.mxu0 0.0
        %367 = vmatpush2.msra.mxu0 0.0
        %368 = vmatprep.subr.mxu0 0.0
        %369 = vmatpush2.msra.mxu0 0.0
        %370 = vmatprep.subr.mxu0 0.0
        %371 = vmatpush2.msra.mxu0 0.0
        %372 = vmatprep.subr.mxu0 0.0
        %373 = vmatpush2.msra.mxu0 0.0
        %374 = vmatprep.subr.mxu0 0.0
        %375 = vmatpush2.msra.mxu0 0.0
        %376 = vmatprep.subr.mxu0 0.0
        %377 = vmatpush2.msra.mxu0 0.0
        %378 = vmatprep.subr.mxu0 0.0
        %379 = vmatpush2.msra.mxu0 0.0
        %380 = vmatprep.subr.mxu0 0.0
        %381 = vmatpush2.msra.mxu0 0.0
        %382 = vmatprep.subr.mxu0 0.0
        %383 = vmatpush2.msra.mxu0 0.0
        %384 = vmatprep.subr.mxu0 0.0
        %385 = vmatpush2.msra.mxu0 0.0
        %386 = vmatprep.mubr.f32.mxu0 0.0
        %387 = vmatmul.mubr.f32.gmra.mxu0 %v320
        %v388 = vpop.f32.mrf.mxu0
        %v389 = vadd.f32 0.0, %v388
        %v390 = vpop.f32.mrf.mxu0
        %v391 = vadd.f32 0.0, %v390
        %392 = vdwg.mxu0
        %v393 = vlaneseq
        %v394 = vshrl.u32 %v393, 7
        %v395 = vlaneseq
        %v396 = vshrl.u32 %v395, 7
        %v397 = vsub.s32 0, %v396
        %v398 = vrot.slane %v315, %v397
        %v399 = vlaneseq
        %v400 = vshrl.u32 %v399, 7
        %v401 = vsub.s32 1, %v400
        %v402 = vrot.slane %v315, %v401
        %vm403 = vcmp.eq.s32.totalorder %v398, %v394
        %vm404 = vcmp.eq.s32.totalorder %v402, %v394
        %406 = vset.pattern.permute.xlu0 0
        %407 = vperm.xlu0 %406, %v317
        %v408 = vpop.permute.xlu0 %407
        %v410 = vadd.f32 %v408, %v389
        %v411 = vadd.f32 %v408, %v391
        %v412 = vsel %vm403, %v410, 0.0
        %v413 = vsel %vm404, %v411, 0.0
        %v414 = vrot.slane %v412, 4
        %v415 = vadd.f32 %v412, %v414
        %v416 = vrot.slane %v415, 2
        %v417 = vadd.f32 %v415, %v416
        %v418 = vrot.slane %v417, 1
        %v419 = vadd.f32 %v417, %v418
        %v420 = vrot.slane %v413, 4
        %v421 = vadd.f32 %v413, %v420
        %v422 = vrot.slane %v421, 2
        %v423 = vadd.f32 %v421, %v422
        %v424 = vrot.slane %v423, 1
        %v425 = vadd.f32 %v423, %v424
        %v426 = vmul.f32 %v307, %v307
        %v427 = vmul.f32 %v308, %v308
        %v428 = vmul.f32 %v309, %v309
        %v429 = vmul.f32 %v310, %v310
        %v430 = vmul.f32 %v311, %v311
        %v431 = vmul.f32 %v312, %v312
        %v432 = vmul.f32 %v313, %v313
        %v433 = vmul.f32 %v314, %v314
        %v434 = vadd.f32 %v426, %v428
        %v435 = vadd.f32 %v434, %v430
        %v436 = vadd.f32 %v435, %v432
        %v437 = vrot.slane %v436, 4
        %v438 = vadd.f32 %v436, %v437
        %v439 = vrot.slane %v438, 2
        %v440 = vadd.f32 %v438, %v439
        %v441 = vrot.slane %v440, 1
        %v442 = vadd.f32 %v440, %v441
        %v443 = vadd.f32 %v427, %v429
        %v444 = vadd.f32 %v443, %v431
        %v445 = vadd.f32 %v444, %v433
        %v446 = vrot.slane %v445, 4
        %v447 = vadd.f32 %v445, %v446
        %v448 = vrot.slane %v447, 2
        %v449 = vadd.f32 %v447, %v448
        %v450 = vrot.slane %v449, 1
        %v451 = vadd.f32 %v449, %v450
        %v452 = vadd.f32 %v442, %v419
        %v453 = vadd.f32 %v451, %v425
        %s454 = smul.u32 %s25, 256
        %v455 = vlaneseq
        %v456 = vand.u32 %v455, 127
        %v457 = vadd.s32 %v456, 128
        %v458 = vstv %s454
        %v459 = vadd.s32 %v458, %v456
        %v460 = vadd.s32 %v458, %v457
        %vm461 = vcmp.lt.s32.totalorder %v459, 256
        %vm462 = vcmp.lt.s32.totalorder %v460, 256
        %vm463 = vcmp.ne.s32.totalorder %v315, 0
        %v464 = vsel %vm463, 1, 0
        %v465 = vlaneseq
        %v466 = vshrl.u32 %v465, 7
        %v467 = vsub.s32 0, %v466
        %v468 = vrot.slane %v464, %v467
        %v469 = vlaneseq
        %v470 = vshrl.u32 %v469, 7
        %v471 = vsub.s32 1, %v470
        %v472 = vrot.slane %v464, %v471
        %vm473 = vcmp.ne.s32.totalorder %v468, 0
        %vm474 = vcmp.ne.s32.totalorder %v472, 0
        %vm475 = vmand %vm461, %vm473
        %vm476 = vmand %vm462, %vm474
        %vm477 = vcmp.ne.s32.totalorder %v315, 255
        %v478 = vsel %vm477, 1, 0
        %v479 = vlaneseq
        %v480 = vshrl.u32 %v479, 7
        %v481 = vsub.s32 0, %v480
        %v482 = vrot.slane %v478, %v481
        %v483 = vlaneseq
        %v484 = vshrl.u32 %v483, 7
        %v485 = vsub.s32 1, %v484
        %v486 = vrot.slane %v478, %v485
        %vm487 = vcmp.ne.s32.totalorder %v482, 0
        %vm488 = vcmp.ne.s32.totalorder %v486, 0
        %vm489 = vmand %vm475, %vm487
        %vm490 = vmand %vm476, %vm488
        %v491 = vld [vmem:[%s296] sm:$0x1]
        %v492 = vsel %vm489, %v452, 0.0
        %v493 = vsel %vm490, %v453, 0.0
        %vm494 = vcmask 1040384
        %v495 = vsel %vm494, %v492, 0.0
        %v496 = vsel %vm494, %v493, 0.0
        %v497 = vadd.f32 %v495, %v496
        %498 = vadd.xlane.f32.xlu0 %v497
        %v499 = vpop.xlane.xlu0 %498
        %v500 = vrot.slane %v499, 4
        %v501 = vadd.f32 %v499, %v500
        %v502 = vrot.slane %v501, 2
        %v503 = vadd.f32 %v501, %v502
        %v504 = vrot.slane %v503, 1
        %v505 = vadd.f32 %v503, %v504
        %s506 = vtos %v505
        %v507 = vstv %s506
        %v508 = vadd.f32 %v491, %v507
        %vm509 = vcmask 0
        %510 = vst.msk [vmem:[%s296] sm:$0x1] %vm509, %v508
        %v511 = vld [vmem:[%s299] sm:$0x1]
        %v512 = vsel %vm489, 1, 0
        %v513 = vsel %vm490, 1, 0
        %v514 = vcvt.s32.f32 %v512
        %v515 = vcvt.s32.f32 %v513
        %v516 = vsel %vm494, %v514, 0.0
        %v517 = vsel %vm494, %v515, 0.0
        %v518 = vadd.f32 %v516, %v517
        %519 = vadd.xlane.f32.xlu0 %v518
        %v520 = vpop.xlane.xlu0 %519
        %v521 = vrot.slane %v520, 4
        %v522 = vadd.f32 %v520, %v521
        %v523 = vrot.slane %v522, 2
        %v524 = vadd.f32 %v522, %v523
        %v525 = vrot.slane %v524, 1
        %v526 = vadd.f32 %v524, %v525
        %s527 = vtos %v526
        %v528 = vstv %s527
        %v529 = vadd.f32 %v511, %v528
        %530 = vst.msk [vmem:[%s299] sm:$0x1] %vm509, %v529
        %p531 = scmp.lt.s32.totalorder %s24, 1
        %s532 = scalar_select %p531, %s24, 1
        %s533 = scalar_lea.vmem %s4, %s532
        %p534 = scmp.lt.s32.totalorder %s24, 1
        %s535 = scalar_select %p534, %s24, 1
        %s536 = scalar_lea.vmem %s5, %s535
        // Predicated region
        $region45: #{tpu_custom_call.1} parent=35 // pred_check
          %p537 = pneg %p148
        $region46: #{tpu_custom_call.1} parent=35 // pred_check_branch
          %539 = sbr.rel (%p537) target = $region48
        $region47: #{tpu_custom_call.1} parent=35 // pred_region
          _
        $region48: #{tpu_custom_call.1} parent=35 // pred_fallthru
          _
        // Predicated region
        $region49: #{tpu_custom_call.1} parent=35 // pred_check
          %p540 = pneg %p174
        $region50: #{tpu_custom_call.1} parent=35 // pred_check_branch
          %542 = sbr.rel (%p540) target = $region52
        $region51: #{tpu_custom_call.1} parent=35 // pred_region
          _
        $region52: #{tpu_custom_call.1} parent=35 // pred_fallthru
          _
      $region36: #{tpu_custom_call.1} parent=5 // pred_fallthru
        _
      %p543 = scmp.le.s32.totalorder 2, %s15
      // Predicated region
      $region53: #{tpu_custom_call.1} parent=5 // pred_check
        %p544 = pneg %p543
      $region54: #{tpu_custom_call.1} parent=5 // pred_check_branch
        %546 = sbr.rel (%p544) target = $region56
      $region55: #{tpu_custom_call.1} parent=5 // pred_region
        %s547 = ssub.s32 %s15, 2
        // Predicated region
        $region57: #{tpu_custom_call.1} parent=55 // pred_check
          %p548 = pneg %p154
        $region58: #{tpu_custom_call.1} parent=55 // pred_check_branch
          %550 = sbr.rel (%p548) target = $region60
        $region59: #{tpu_custom_call.1} parent=55 // pred_region
          %p551 = scmp.lt.s32.totalorder %s26, 1
          %s552 = scalar_select %p551, %s26, 1
          %s553 = scalar_lea.vmem %s4, %s552
        $region60: #{tpu_custom_call.1} parent=55 // pred_fallthru
          _
        // Predicated region
        $region61: #{tpu_custom_call.1} parent=55 // pred_check
          %p554 = pneg %p180
        $region62: #{tpu_custom_call.1} parent=55 // pred_check_branch
          %556 = sbr.rel (%p554) target = $region64
        $region63: #{tpu_custom_call.1} parent=55 // pred_region
          %p557 = scmp.lt.s32.totalorder %s26, 1
          %s558 = scalar_select %p557, %s26, 1
          %s559 = scalar_lea.vmem %s5, %s558
        $region64: #{tpu_custom_call.1} parent=55 // pred_fallthru
          _
      $region56: #{tpu_custom_call.1} parent=5 // pred_fallthru
        _
    $region6: #{tpu_custom_call.1} parent=1 // loop_footer
      %s19 = sadd.s32 1, %s15
    $region7: #{tpu_custom_call.1} parent=1 // loop_footer_branch
      %14 = sbr.rel target = $region3
    $region8: #{tpu_custom_call.1} parent=1 // loop_exit
      _
    %560 = vsyncpa [#allocation3], 1
    %s561 = scalar_lea.sflag [#allocation3], 1
    %562 = vsyncpa %s561, 1

</llo_original>
